<compile_context>
chip_gen: v7x
topology: tpu7x:2x2x1
jax: 0.10.0
libtpu: 0.0.40
codegen_flags: <defaults>
</compile_context>

<pallas_src>
import jax
import jax.numpy as jnp
import numpy as np
from jax.experimental import pallas as pl
from jax.experimental.pallas import tpu as pltpu

LAMBDA_COORD = 5.0
LAMBDA_NOOBJ = 0.5
OUT_LANES = 128
MAX_TB = 256          # ~<5 MiB of double-buffered streamed input per step; safe on v5e/v6e/v7x


def make_grid(grid_size=(7, 7)):
    """(S*S, 4) grid-cell boxes [y1, x1, y2, x2] normalized to [0, 1]."""
    gy, gx = grid_size
    ys = jnp.arange(gy, dtype=jnp.float32) / gy
    xs = jnp.arange(gx, dtype=jnp.float32) / gx
    y1, x1 = jnp.meshgrid(ys, xs, indexing="ij")
    y2 = y1 + 1.0 / gy
    x2 = x1 + 1.0 / gx
    return jnp.stack([y1, x1, y2, x2], axis=-1).reshape(gy * gx, 4)


def _yolo_loss_kernel(cells_ref, gt_geo_ref, gt_feat_ref, preds_ref, out_ref):
    TB, G, _ = gt_geo_ref.shape
    C = gt_feat_ref.shape[1] - 4
    S2P = cells_ref.shape[-1]

    cells = cells_ref[...]                        # (6, S2P)
    cy1 = cells[0:1, :][None]                     # (1, 1, S2P)
    cx1 = cells[1:2, :][None]
    cy2 = cells[2:3, :][None]
    cx2 = cells[3:4, :][None]
    area_c = cells[4:5, :][None]                  # cell area precomputed in the wrapper
    valid = cells[5:6, :]                         # (1, S2P) -> kills padded cells

    geo = gt_geo_ref[...]                         # (TB, G, 5)
    gy1 = geo[:, :, 0:1]
    gx1 = geo[:, :, 1:2]
    gy2 = geo[:, :, 2:3]
    gx2 = geo[:, :, 3:4]
    area_g = geo[:, :, 4:5]

    # pairwise IoU(grid cell, gt box): (TB, G, S2P), lane-dense on the cell axis
    iy = jnp.maximum(jnp.minimum(cy2, gy2) - jnp.maximum(cy1, gy1), 0.0)
    ix = jnp.maximum(jnp.minimum(cx2, gx2) - jnp.maximum(cx1, gx1), 0.0)
    inter = iy * ix
    # approx reciprocal (EUP slot) is safe: iou only feeds max / == / > 0 comparisons,
    # all on the SAME tensor; eps guards 0/0 for degenerate zero-area padded GT boxes.
    iou = inter * pl.reciprocal(area_c + area_g - inter + 1e-12, approx=True)

    max_iou = jnp.max(iou, axis=1)                                  # (TB, S2P)
    mask = (max_iou > 0.0).astype(jnp.float32) * valid              # (TB, S2P)

    # fused first-match (argmax tie-break on lowest g) + gather of the whole
    # (4+C)-row gt feature block -- pure VPU lane-broadcast FMAs, no one-hot slab,
    # no MXU, no concatenate.
    feat = gt_feat_ref[...]                       # (TB, 4+C, G)
    max_b = max_iou[:, None, :]                   # (TB, 1, S2P)
    remaining = jnp.ones((TB, 1, S2P), jnp.float32)
    gathered = jnp.zeros((TB, 4 + C, S2P), jnp.float32)
    for g in range(G):                            # G is tiny & static
        take = (iou[:, g:g + 1, :] == max_b).astype(jnp.float32) * remaining
        remaining = remaining - take
        gathered = gathered + take * feat[:, :, g:g + 1]

    pred = preds_ref[...]                         # (TB, RP, S2P)
    pb = pred[:, 0:8, :]                          # [y, x, h, w] * 2 boxes
    conf = pred[:, 8:10, :]                       # 2 confidences
    logits = pred[:, 10:10 + C, :]                # C class logits

    # --- classification: masked sum of cross entropy ---
    tgt = gathered[:, 4:, :]                      # (TB, C, S2P) one-hot class target
    m = jnp.max(logits, axis=1, keepdims=True)
    lse = jnp.log(jnp.sum(jnp.exp(logits - m), axis=1, keepdims=True)) + m
    logp = logits - lse
    ce = -jnp.sum(tgt * logp, axis=1)             # (TB, S2P)
    cls_pc = ce * mask

    # --- confidence: (1 + lambda_noobj) * masked sum over the 2 boxes ---
    d = mask[:, None, :] - conf
    conf_pc = (1.0 + LAMBDA_NOOBJ) * jnp.sum(d * d, axis=1) * mask

    # --- box: lambda_coord * masked pos + size squared errors over the 2 boxes ---
    g_yx = gathered[:, 0:2, :]
    g_hw_s = jnp.sqrt(gathered[:, 2:4, :])
    terms = jnp.zeros((TB, S2P), jnp.float32)
    for off in (0, 4):
        dydx = g_yx - pb[:, off:off + 2, :]
        dhdw = g_hw_s - jnp.sqrt(pb[:, off + 2:off + 4, :])
        terms = terms + jnp.sum(dydx * dydx + dhdw * dhdw, axis=1)
    box_pc = LAMBDA_COORD * terms * mask

    # single unmasked lane-dense store: lanes 0/1/2 = box / cls / conf per image
    box_s = jnp.sum(box_pc, axis=-1)[:, None, None]
    cls_s = jnp.sum(cls_pc, axis=-1)[:, None, None]
    conf_s = jnp.sum(conf_pc, axis=-1)[:, None, None]
    lane = jax.lax.broadcasted_iota(jnp.int32, out_ref.shape, 2)
    out_ref[...] = (jnp.where(lane == 0, box_s, 0.0)
                    + jnp.where(lane == 1, cls_s, 0.0)
                    + jnp.where(lane == 2, conf_s, 0.0))


def yolo_v1_loss(preds, gts, grid_cells):
    labels = preds["labels"].astype(jnp.float32)       # (B, S2, C)
    boxes = preds["boxes"].astype(jnp.float32)         # (B, S2, 2, 4)
    scores = preds["scores"].astype(jnp.float32)       # (B, S2, 2)
    gt_boxes = gts["boxes"].astype(jnp.float32)        # (B, G, 4) yxhw
    gt_labels = gts["labels"]                          # (B, G) int32

    B, S2, C = labels.shape
    G = gt_boxes.shape[1]
    S2P = ((S2 + 127) // 128) * 128                    # cells padded onto full lanes

    # batch tile: as large as possible (per-step footprint is only a few KB/image)
    # but keep >= 2 grid steps when B >= 2 so both v7x TensorCores get work.
    if B <= 1:
        TB = 1
    else:
        TB = min((B + 1) // 2, MAX_TB)
    Bp = ((B + TB - 1) // TB) * TB

    # --- pack all per-cell predictions into ONE lane-dense slab (16 rows = 2 sublane tiles)
    R = 8 + 2 + C
    RP = ((R + 7) // 8) * 8
    packed = jnp.concatenate([boxes.reshape(B, S2, 8), scores, labels], axis=-1)  # (B, S2, R)
    packed = jnp.transpose(packed, (0, 2, 1))                                     # (B, R, S2)
    packed = jnp.pad(packed, ((0, Bp - B), (0, RP - R), (0, S2P - S2)))           # (Bp, RP, S2P)

    # grid cells: rows [y1, x1, y2, x2, area, valid]; padded cells get valid = 0 / area = 0.
    c = grid_cells.astype(jnp.float32)                             # (S2, 4)
    area_c = ((c[:, 2] - c[:, 0]) * (c[:, 3] - c[:, 1]))[None, :]
    cells6 = jnp.concatenate([c.T, area_c, jnp.ones((1, S2), jnp.float32)], axis=0)
    cells6 = jnp.pad(cells6, ((0, 0), (0, S2P - S2)))              # (6, S2P)

    yx, hw = gt_boxes[..., 0:2], gt_boxes[..., 2:4]
    gt_geo = jnp.concatenate([yx - 0.5 * hw, yx + 0.5 * hw,
                              hw[..., 0:1] * hw[..., 1:2]], axis=-1)        # (B, G, 5)
    gt_geo = jnp.pad(gt_geo, ((0, Bp - B), (0, 0), (0, 0)))

    gt_onehot = jax.nn.one_hot(gt_labels, C, dtype=jnp.float32)             # (B, G, C)
    gt_feat = jnp.concatenate([jnp.transpose(gt_boxes, (0, 2, 1)),
                               jnp.transpose(gt_onehot, (0, 2, 1))], axis=1)  # (B, 4+C, G)
    gt_feat = jnp.pad(gt_feat, ((0, Bp - B), (0, 0), (0, 0)))

    out = pl.pallas_call(
        _yolo_loss_kernel,
        out_shape=jax.ShapeDtypeStruct((Bp, 1, OUT_LANES), jnp.float32),
        grid=(Bp // TB,),
        in_specs=[
            pl.BlockSpec((6, S2P), lambda b: (0, 0)),
            pl.BlockSpec((TB, G, 5), lambda b: (b, 0, 0)),
            pl.BlockSpec((TB, 4 + C, G), lambda b: (b, 0, 0)),
            pl.BlockSpec((TB, RP, S2P), lambda b: (b, 0, 0)),
        ],
        out_specs=pl.BlockSpec((TB, 1, OUT_LANES), lambda b: (b, 0, 0)),
        compiler_params=pltpu.CompilerParams(dimension_semantics=("parallel",)),
    )(cells6, gt_geo, gt_feat, packed)

    per_img = out[:B, 0, :]
    return {
        "box_loss": jnp.mean(per_img[:, 0]),
        "classification_loss": jnp.mean(per_img[:, 1]),
        "confidence_loss": jnp.mean(per_img[:, 2]),
    }


def yolo_v1_loss_ref(preds, gts, cells):
    """Pure-JAX reference mirroring the torch module semantics (exact arithmetic)."""
    B, S2, C = preds["labels"].shape

    def per_image(gtb, gtl, logits, pb, sc):
        gt_yxyx = jnp.concatenate(
            [gtb[:, :2] - gtb[:, 2:] / 2, gtb[:, :2] + gtb[:, 2:] / 2], axis=1)
        y1 = jnp.maximum(cells[:, None, 0], gt_yxyx[None, :, 0])
        x1 = jnp.maximum(cells[:, None, 1], gt_yxyx[None, :, 1])
        y2 = jnp.minimum(cells[:, None, 2], gt_yxyx[None, :, 2])
        x2 = jnp.minimum(cells[:, None, 3], gt_yxyx[None, :, 3])
        inter = jnp.maximum(y2 - y1, 0.0) * jnp.maximum(x2 - x1, 0.0)
        area_c = (cells[:, 2] - cells[:, 0]) * (cells[:, 3] - cells[:, 1])
        area_g = gtb[:, 2] * gtb[:, 3]
        iou = inter / (area_c[:, None] + area_g[None, :] - inter)
        max_iou = iou.max(axis=1)
        idx = jnp.argmax(iou, axis=1)
        mask = max_iou > 0.0

        logp = jax.nn.log_softmax(logits, axis=-1)
        ce = -logp[jnp.arange(S2), gtl[idx]]
        cls_loss = jnp.sum(jnp.where(mask, ce, 0.0))

        gt_conf = mask.astype(jnp.float32)[:, None] * jnp.ones((1, 2), jnp.float32)
        sq = (gt_conf - sc) ** 2
        conf_loss = (1.0 + LAMBDA_NOOBJ) * jnp.sum(jnp.where(mask[:, None], sq, 0.0))

        g = gtb[idx]
        gtt = jnp.tile(g[:, None, :], (1, 2, 1))
        dydx = gtt[..., :2] - pb[..., :2]
        dhdw = jnp.sqrt(gtt[..., 2:]) - jnp.sqrt(pb[..., 2:])
        box_loss = LAMBDA_COORD * (
            jnp.sum(jnp.where(mask[:, None, None], dydx ** 2, 0.0))
            + jnp.sum(jnp.where(mask[:, None, None], dhdw ** 2, 0.0)))
        return box_loss, cls_loss, conf_loss

    outs = [per_image(gts["boxes"][b], gts["labels"][b], preds["labels"][b],
                      preds["boxes"][b], preds["scores"][b]) for b in range(B)]
    box = jnp.mean(jnp.stack([o[0] for o in outs]))
    cls = jnp.mean(jnp.stack([o[1] for o in outs]))
    conf = jnp.mean(jnp.stack([o[2] for o in outs]))
    return {"box_loss": box, "classification_loss": cls, "confidence_loss": conf}


if __name__ == "__main__":
    B, G, C = 2, 3, 4
    grid_size = (7, 7)
    S2 = grid_size[0] * grid_size[1]

    key = jax.random.PRNGKey(0)
    k1, k2, k3, k4, k5, k6, k7 = jax.random.split(key, 7)

    gt_centers = jax.random.uniform(k1, (B, G, 2), minval=0.1, maxval=0.9)
    gt_sizes = jax.random.uniform(k2, (B, G, 2), minval=0.05, maxval=0.35)
    gt_boxes = jnp.concatenate([gt_centers, gt_sizes], axis=-1)            # (B, G, 4) yxhw
    gt_labels = jax.random.randint(k3, (B, G), 0, C, dtype=jnp.int32)

    pred_labels = jax.random.normal(k4, (B, S2, C), dtype=jnp.float32)
    pred_yx = jax.random.uniform(k5, (B, S2, 2, 2), minval=0.0, maxval=1.0)
    pred_hw = jax.random.uniform(k6, (B, S2, 2, 2), minval=0.05, maxval=0.6)
    pred_boxes = jnp.concatenate([pred_yx, pred_hw], axis=-1)              # (B, S2, 2, 4)
    pred_scores = jax.random.uniform(k7, (B, S2, 2), minval=0.0, maxval=1.0)

    preds = {"labels": pred_labels, "boxes": pred_boxes, "scores": pred_scores}
    gts = {"labels": gt_labels, "boxes": gt_boxes}
    grid_cells = make_grid(grid_size)

    out = yolo_v1_loss(preds, gts, grid_cells)
    out = jax.block_until_ready(out)

    ref = jax.block_until_ready(yolo_v1_loss_ref(preds, gts, grid_cells))
    for name in ("box_loss", "classification_loss", "confidence_loss"):
        np.testing.assert_allclose(np.asarray(out[name]), np.asarray(ref[name]),
                                   rtol=2e-4, atol=1e-3)

    print("KERNEL_OK")
</pallas_src>

<mosaic_0001>
module attributes {stable_mosaic.version = 11 : i64} {
  func.func @_yolo_loss_kernel(%arg0: i32, %arg1: memref<6x128xf32, #tpu.memory_space<vmem>>, %arg2: memref<1x3x5xf32, #tpu.memory_space<vmem>>, %arg3: memref<1x8x3xf32, #tpu.memory_space<vmem>>, %arg4: memref<1x16x128xf32, #tpu.memory_space<vmem>>, %arg5: memref<1x1x128xf32, #tpu.memory_space<vmem>>) attributes {dimension_semantics = [#tpu.dimension_semantics<parallel>], iteration_bounds = array<i64: 2>, scalar_prefetch = 0 : i64, scratch_operands = 0 : i64, tpu.core_type = #tpu.core_type<tc>, window_params = [{pipeline_mode = #tpu.pipeline_mode<synchronous>, transform_indices = @transform_0, window_bounds = array<i64: 6, 128>}, {transform_indices = @transform_1, window_bounds = array<i64: 1, 3, 5>}, {transform_indices = @transform_2, window_bounds = array<i64: 1, 8, 3>}, {transform_indices = @transform_3, window_bounds = array<i64: 1, 16, 128>}, {transform_indices = @transform_4, window_bounds = array<i64: 1, 1, 128>}]} {
    %c0 = arith.constant 0 : index
    %c0_0 = arith.constant 0 : index
    %0 = vector.load %arg1[%c0, %c0_0] : memref<6x128xf32, #tpu.memory_space<vmem>>, vector<6x128xf32>
    %1 = vector.extract_strided_slice %0 {offsets = [0, 0], sizes = [1, 128], strides = [1, 1]} : vector<6x128xf32> to vector<1x128xf32>
    %2 = vector.shape_cast %1 : vector<1x128xf32> to vector<1x1x128xf32>
    %3 = vector.extract_strided_slice %0 {offsets = [1, 0], sizes = [1, 128], strides = [1, 1]} : vector<6x128xf32> to vector<1x128xf32>
    %4 = vector.shape_cast %3 : vector<1x128xf32> to vector<1x1x128xf32>
    %5 = vector.extract_strided_slice %0 {offsets = [2, 0], sizes = [1, 128], strides = [1, 1]} : vector<6x128xf32> to vector<1x128xf32>
    %6 = vector.shape_cast %5 : vector<1x128xf32> to vector<1x1x128xf32>
    %7 = vector.extract_strided_slice %0 {offsets = [3, 0], sizes = [1, 128], strides = [1, 1]} : vector<6x128xf32> to vector<1x128xf32>
    %8 = vector.shape_cast %7 : vector<1x128xf32> to vector<1x1x128xf32>
    %9 = vector.extract_strided_slice %0 {offsets = [4, 0], sizes = [1, 128], strides = [1, 1]} : vector<6x128xf32> to vector<1x128xf32>
    %10 = vector.shape_cast %9 : vector<1x128xf32> to vector<1x1x128xf32>
    %11 = vector.extract_strided_slice %0 {offsets = [5, 0], sizes = [1, 128], strides = [1, 1]} : vector<6x128xf32> to vector<1x128xf32>
    %c0_1 = arith.constant 0 : index
    %c0_2 = arith.constant 0 : index
    %c0_3 = arith.constant 0 : index
    %12 = vector.load %arg2[%c0_1, %c0_2, %c0_3] : memref<1x3x5xf32, #tpu.memory_space<vmem>>, vector<1x3x5xf32>
    %13 = vector.extract_strided_slice %12 {offsets = [0, 0, 0], sizes = [1, 3, 1], strides = [1, 1, 1]} : vector<1x3x5xf32> to vector<1x3x1xf32>
    %14 = vector.extract_strided_slice %12 {offsets = [0, 0, 1], sizes = [1, 3, 1], strides = [1, 1, 1]} : vector<1x3x5xf32> to vector<1x3x1xf32>
    %15 = vector.extract_strided_slice %12 {offsets = [0, 0, 2], sizes = [1, 3, 1], strides = [1, 1, 1]} : vector<1x3x5xf32> to vector<1x3x1xf32>
    %16 = vector.extract_strided_slice %12 {offsets = [0, 0, 3], sizes = [1, 3, 1], strides = [1, 1, 1]} : vector<1x3x5xf32> to vector<1x3x1xf32>
    %17 = vector.extract_strided_slice %12 {offsets = [0, 0, 4], sizes = [1, 3, 1], strides = [1, 1, 1]} : vector<1x3x5xf32> to vector<1x3x1xf32>
    %18 = vector.broadcast %6 : vector<1x1x128xf32> to vector<1x3x128xf32>
    %19 = vector.broadcast %15 : vector<1x3x1xf32> to vector<1x3x128xf32>
    %20 = arith.minimumf %18, %19 : vector<1x3x128xf32>
    %21 = vector.broadcast %2 : vector<1x1x128xf32> to vector<1x3x128xf32>
    %22 = vector.broadcast %13 : vector<1x3x1xf32> to vector<1x3x128xf32>
    %23 = arith.maximumf %21, %22 : vector<1x3x128xf32>
    %24 = arith.subf %20, %23 : vector<1x3x128xf32>
    %cst = arith.constant 0.000000e+00 : f32
    %25 = vector.broadcast %cst : f32 to vector<1x3x128xf32>
    %26 = arith.maximumf %24, %25 : vector<1x3x128xf32>
    %27 = vector.broadcast %8 : vector<1x1x128xf32> to vector<1x3x128xf32>
    %28 = vector.broadcast %16 : vector<1x3x1xf32> to vector<1x3x128xf32>
    %29 = arith.minimumf %27, %28 : vector<1x3x128xf32>
    %30 = vector.broadcast %4 : vector<1x1x128xf32> to vector<1x3x128xf32>
    %31 = vector.broadcast %14 : vector<1x3x1xf32> to vector<1x3x128xf32>
    %32 = arith.maximumf %30, %31 : vector<1x3x128xf32>
    %33 = arith.subf %29, %32 : vector<1x3x128xf32>
    %cst_4 = arith.constant 0.000000e+00 : f32
    %34 = vector.broadcast %cst_4 : f32 to vector<1x3x128xf32>
    %35 = arith.maximumf %33, %34 : vector<1x3x128xf32>
    %36 = arith.mulf %26, %35 : vector<1x3x128xf32>
    %37 = vector.broadcast %10 : vector<1x1x128xf32> to vector<1x3x128xf32>
    %38 = vector.broadcast %17 : vector<1x3x1xf32> to vector<1x3x128xf32>
    %39 = arith.addf %37, %38 : vector<1x3x128xf32>
    %40 = arith.subf %39, %36 : vector<1x3x128xf32>
    %cst_5 = arith.constant 9.99999996E-13 : f32
    %41 = vector.broadcast %cst_5 : f32 to vector<1x3x128xf32>
    %42 = arith.addf %40, %41 : vector<1x3x128xf32>
    %43 = tpu.reciprocal %42 {approx = true} : vector<1x3x128xf32> -> vector<1x3x128xf32>
    %44 = arith.mulf %36, %43 : vector<1x3x128xf32>
    %cst_6 = arith.constant dense<0xFF800000> : vector<1x128xf32>
    %45 = vector.multi_reduction <maximumf>, %44, %cst_6 [1] : vector<1x3x128xf32> to vector<1x128xf32>
    %cst_7 = arith.constant 0.000000e+00 : f32
    %46 = vector.broadcast %cst_7 : f32 to vector<1x128xf32>
    %47 = arith.cmpf ogt, %45, %46 : vector<1x128xf32>
    %48 = arith.extui %47 : vector<1x128xi1> to vector<1x128xi32>
    %49 = arith.sitofp %48 : vector<1x128xi32> to vector<1x128xf32>
    %50 = arith.mulf %49, %11 : vector<1x128xf32>
    %c0_8 = arith.constant 0 : index
    %c0_9 = arith.constant 0 : index
    %c0_10 = arith.constant 0 : index
    %51 = vector.load %arg3[%c0_8, %c0_9, %c0_10] : memref<1x8x3xf32, #tpu.memory_space<vmem>>, vector<1x8x3xf32>
    %52 = vector.shape_cast %45 : vector<1x128xf32> to vector<1x1x128xf32>
    %cst_11 = arith.constant 1.000000e+00 : f32
    %53 = vector.broadcast %cst_11 : f32 to vector<1x1x128xf32>
    %cst_12 = arith.constant 0.000000e+00 : f32
    %54 = vector.broadcast %cst_12 : f32 to vector<1x8x128xf32>
    %55 = vector.extract_strided_slice %44 {offsets = [0, 0, 0], sizes = [1, 1, 128], strides = [1, 1, 1]} : vector<1x3x128xf32> to vector<1x1x128xf32>
    %56 = arith.cmpf oeq, %55, %52 : vector<1x1x128xf32>
    %57 = arith.extui %56 : vector<1x1x128xi1> to vector<1x1x128xi32>
    %58 = arith.sitofp %57 : vector<1x1x128xi32> to vector<1x1x128xf32>
    %59 = arith.mulf %58, %53 : vector<1x1x128xf32>
    %60 = arith.subf %53, %59 : vector<1x1x128xf32>
    %61 = vector.extract_strided_slice %51 {offsets = [0, 0, 0], sizes = [1, 8, 1], strides = [1, 1, 1]} : vector<1x8x3xf32> to vector<1x8x1xf32>
    %62 = vector.broadcast %59 : vector<1x1x128xf32> to vector<1x8x128xf32>
    %63 = vector.broadcast %61 : vector<1x8x1xf32> to vector<1x8x128xf32>
    %64 = arith.mulf %62, %63 : vector<1x8x128xf32>
    %65 = arith.addf %54, %64 : vector<1x8x128xf32>
    %66 = vector.extract_strided_slice %44 {offsets = [0, 1, 0], sizes = [1, 1, 128], strides = [1, 1, 1]} : vector<1x3x128xf32> to vector<1x1x128xf32>
    %67 = arith.cmpf oeq, %66, %52 : vector<1x1x128xf32>
    %68 = arith.extui %67 : vector<1x1x128xi1> to vector<1x1x128xi32>
    %69 = arith.sitofp %68 : vector<1x1x128xi32> to vector<1x1x128xf32>
    %70 = arith.mulf %69, %60 : vector<1x1x128xf32>
    %71 = arith.subf %60, %70 : vector<1x1x128xf32>
    %72 = vector.extract_strided_slice %51 {offsets = [0, 0, 1], sizes = [1, 8, 1], strides = [1, 1, 1]} : vector<1x8x3xf32> to vector<1x8x1xf32>
    %73 = vector.broadcast %70 : vector<1x1x128xf32> to vector<1x8x128xf32>
    %74 = vector.broadcast %72 : vector<1x8x1xf32> to vector<1x8x128xf32>
    %75 = arith.mulf %73, %74 : vector<1x8x128xf32>
    %76 = arith.addf %65, %75 : vector<1x8x128xf32>
    %77 = vector.extract_strided_slice %44 {offsets = [0, 2, 0], sizes = [1, 1, 128], strides = [1, 1, 1]} : vector<1x3x128xf32> to vector<1x1x128xf32>
    %78 = arith.cmpf oeq, %77, %52 : vector<1x1x128xf32>
    %79 = arith.extui %78 : vector<1x1x128xi1> to vector<1x1x128xi32>
    %80 = arith.sitofp %79 : vector<1x1x128xi32> to vector<1x1x128xf32>
    %81 = arith.mulf %80, %71 : vector<1x1x128xf32>
    %82 = vector.extract_strided_slice %51 {offsets = [0, 0, 2], sizes = [1, 8, 1], strides = [1, 1, 1]} : vector<1x8x3xf32> to vector<1x8x1xf32>
    %83 = vector.broadcast %81 : vector<1x1x128xf32> to vector<1x8x128xf32>
    %84 = vector.broadcast %82 : vector<1x8x1xf32> to vector<1x8x128xf32>
    %85 = arith.mulf %83, %84 : vector<1x8x128xf32>
    %86 = arith.addf %76, %85 : vector<1x8x128xf32>
    %c0_13 = arith.constant 0 : index
    %c0_14 = arith.constant 0 : index
    %c0_15 = arith.constant 0 : index
    %87 = vector.load %arg4[%c0_13, %c0_14, %c0_15] : memref<1x16x128xf32, #tpu.memory_space<vmem>>, vector<1x16x128xf32>
    %88 = vector.extract_strided_slice %87 {offsets = [0, 0, 0], sizes = [1, 8, 128], strides = [1, 1, 1]} : vector<1x16x128xf32> to vector<1x8x128xf32>
    %89 = vector.extract_strided_slice %87 {offsets = [0, 8, 0], sizes = [1, 2, 128], strides = [1, 1, 1]} : vector<1x16x128xf32> to vector<1x2x128xf32>
    %90 = vector.extract_strided_slice %87 {offsets = [0, 10, 0], sizes = [1, 4, 128], strides = [1, 1, 1]} : vector<1x16x128xf32> to vector<1x4x128xf32>
    %91 = vector.extract_strided_slice %86 {offsets = [0, 4, 0], sizes = [1, 4, 128], strides = [1, 1, 1]} : vector<1x8x128xf32> to vector<1x4x128xf32>
    %cst_16 = arith.constant dense<0xFF800000> : vector<1x128xf32>
    %92 = vector.multi_reduction <maximumf>, %90, %cst_16 [1] : vector<1x4x128xf32> to vector<1x128xf32>
    %93 = vector.shape_cast %92 : vector<1x128xf32> to vector<1x1x128xf32>
    %94 = vector.broadcast %93 : vector<1x1x128xf32> to vector<1x4x128xf32>
    %95 = arith.subf %90, %94 : vector<1x4x128xf32>
    %96 = math.exp %95 : vector<1x4x128xf32>
    %cst_17 = arith.constant dense<0.000000e+00> : vector<1x128xf32>
    %97 = vector.multi_reduction <add>, %96, %cst_17 [1] : vector<1x4x128xf32> to vector<1x128xf32>
    %98 = vector.shape_cast %97 : vector<1x128xf32> to vector<1x1x128xf32>
    %99 = math.log %98 : vector<1x1x128xf32>
    %100 = arith.addf %99, %93 : vector<1x1x128xf32>
    %101 = vector.broadcast %100 : vector<1x1x128xf32> to vector<1x4x128xf32>
    %102 = arith.subf %90, %101 : vector<1x4x128xf32>
    %103 = arith.mulf %91, %102 : vector<1x4x128xf32>
    %cst_18 = arith.constant dense<0.000000e+00> : vector<1x128xf32>
    %104 = vector.multi_reduction <add>, %103, %cst_18 [1] : vector<1x4x128xf32> to vector<1x128xf32>
    %cst_19 = arith.constant 0.000000e+00 : f32
    %105 = vector.broadcast %cst_19 : f32 to vector<1x128xf32>
    %106 = arith.subf %105, %104 : vector<1x128xf32>
    %107 = arith.mulf %106, %50 : vector<1x128xf32>
    %108 = vector.shape_cast %50 : vector<1x128xf32> to vector<1x1x128xf32>
    %109 = vector.broadcast %108 : vector<1x1x128xf32> to vector<1x2x128xf32>
    %110 = arith.subf %109, %89 : vector<1x2x128xf32>
    %111 = arith.mulf %110, %110 : vector<1x2x128xf32>
    %cst_20 = arith.constant dense<0.000000e+00> : vector<1x128xf32>
    %112 = vector.multi_reduction <add>, %111, %cst_20 [1] : vector<1x2x128xf32> to vector<1x128xf32>
    %cst_21 = arith.constant 1.500000e+00 : f32
    %113 = vector.broadcast %cst_21 : f32 to vector<1x128xf32>
    %114 = arith.mulf %113, %112 : vector<1x128xf32>
    %115 = arith.mulf %114, %50 : vector<1x128xf32>
    %116 = vector.extract_strided_slice %86 {offsets = [0, 0, 0], sizes = [1, 2, 128], strides = [1, 1, 1]} : vector<1x8x128xf32> to vector<1x2x128xf32>
    %117 = vector.extract_strided_slice %86 {offsets = [0, 2, 0], sizes = [1, 2, 128], strides = [1, 1, 1]} : vector<1x8x128xf32> to vector<1x2x128xf32>
    %118 = math.sqrt %117 : vector<1x2x128xf32>
    %cst_22 = arith.constant 0.000000e+00 : f32
    %119 = vector.broadcast %cst_22 : f32 to vector<1x128xf32>
    %120 = vector.extract_strided_slice %88 {offsets = [0, 0, 0], sizes = [1, 2, 128], strides = [1, 1, 1]} : vector<1x8x128xf32> to vector<1x2x128xf32>
    %121 = arith.subf %116, %120 : vector<1x2x128xf32>
    %122 = vector.extract_strided_slice %88 {offsets = [0, 2, 0], sizes = [1, 2, 128], strides = [1, 1, 1]} : vector<1x8x128xf32> to vector<1x2x128xf32>
    %123 = math.sqrt %122 : vector<1x2x128xf32>
    %124 = arith.subf %118, %123 : vector<1x2x128xf32>
    %125 = arith.mulf %121, %121 : vector<1x2x128xf32>
    %126 = arith.mulf %124, %124 : vector<1x2x128xf32>
    %127 = arith.addf %125, %126 : vector<1x2x128xf32>
    %cst_23 = arith.constant dense<0.000000e+00> : vector<1x128xf32>
    %128 = vector.multi_reduction <add>, %127, %cst_23 [1] : vector<1x2x128xf32> to vector<1x128xf32>
    %129 = arith.addf %119, %128 : vector<1x128xf32>
    %130 = vector.extract_strided_slice %88 {offsets = [0, 4, 0], sizes = [1, 2, 128], strides = [1, 1, 1]} : vector<1x8x128xf32> to vector<1x2x128xf32>
    %131 = arith.subf %116, %130 : vector<1x2x128xf32>
    %132 = vector.extract_strided_slice %88 {offsets = [0, 6, 0], sizes = [1, 2, 128], strides = [1, 1, 1]} : vector<1x8x128xf32> to vector<1x2x128xf32>
    %133 = math.sqrt %132 : vector<1x2x128xf32>
    %134 = arith.subf %118, %133 : vector<1x2x128xf32>
    %135 = arith.mulf %131, %131 : vector<1x2x128xf32>
    %136 = arith.mulf %134, %134 : vector<1x2x128xf32>
    %137 = arith.addf %135, %136 : vector<1x2x128xf32>
    %cst_24 = arith.constant dense<0.000000e+00> : vector<1x128xf32>
    %138 = vector.multi_reduction <add>, %137, %cst_24 [1] : vector<1x2x128xf32> to vector<1x128xf32>
    %139 = arith.addf %129, %138 : vector<1x128xf32>
    %cst_25 = arith.constant 5.000000e+00 : f32
    %140 = vector.broadcast %cst_25 : f32 to vector<1x128xf32>
    %141 = arith.mulf %140, %139 : vector<1x128xf32>
    %142 = arith.mulf %141, %50 : vector<1x128xf32>
    %cst_26 = arith.constant dense<0.000000e+00> : vector<1xf32>
    %143 = vector.multi_reduction <add>, %142, %cst_26 [1] : vector<1x128xf32> to vector<1xf32>
    %144 = vector.shape_cast %143 : vector<1xf32> to vector<1x1x1xf32>
    %cst_27 = arith.constant dense<0.000000e+00> : vector<1xf32>
    %145 = vector.multi_reduction <add>, %107, %cst_27 [1] : vector<1x128xf32> to vector<1xf32>
    %146 = vector.shape_cast %145 : vector<1xf32> to vector<1x1x1xf32>
    %cst_28 = arith.constant dense<0.000000e+00> : vector<1xf32>
    %147 = vector.multi_reduction <add>, %115, %cst_28 [1] : vector<1x128xf32> to vector<1xf32>
    %148 = vector.shape_cast %147 : vector<1xf32> to vector<1x1x1xf32>
    %149 = tpu.iota {dimensions = array<i32: 2>} : vector<1x1x128xi32>
    %c0_i32 = arith.constant 0 : i32
    %150 = vector.broadcast %c0_i32 : i32 to vector<1x1x128xi32>
    %151 = arith.cmpi eq, %149, %150 : vector<1x1x128xi32>
    %cst_29 = arith.constant 0.000000e+00 : f32
    %152 = vector.shape_cast %144 : vector<1x1x1xf32> to vector<1x1x1xf32>
    %153 = vector.broadcast %152 : vector<1x1x1xf32> to vector<1x1x128xf32>
    %154 = vector.broadcast %cst_29 : f32 to vector<1x1x128xf32>
    %155 = arith.select %151, %153, %154 : vector<1x1x128xi1>, vector<1x1x128xf32>
    %c1_i32 = arith.constant 1 : i32
    %156 = vector.broadcast %c1_i32 : i32 to vector<1x1x128xi32>
    %157 = arith.cmpi eq, %149, %156 : vector<1x1x128xi32>
    %cst_30 = arith.constant 0.000000e+00 : f32
    %158 = vector.shape_cast %146 : vector<1x1x1xf32> to vector<1x1x1xf32>
    %159 = vector.broadcast %158 : vector<1x1x1xf32> to vector<1x1x128xf32>
    %160 = vector.broadcast %cst_30 : f32 to vector<1x1x128xf32>
    %161 = arith.select %157, %159, %160 : vector<1x1x128xi1>, vector<1x1x128xf32>
    %162 = arith.addf %155, %161 : vector<1x1x128xf32>
    %c2_i32 = arith.constant 2 : i32
    %163 = vector.broadcast %c2_i32 : i32 to vector<1x1x128xi32>
    %164 = arith.cmpi eq, %149, %163 : vector<1x1x128xi32>
    %cst_31 = arith.constant 0.000000e+00 : f32
    %165 = vector.shape_cast %148 : vector<1x1x1xf32> to vector<1x1x1xf32>
    %166 = vector.broadcast %165 : vector<1x1x1xf32> to vector<1x1x128xf32>
    %167 = vector.broadcast %cst_31 : f32 to vector<1x1x128xf32>
    %168 = arith.select %164, %166, %167 : vector<1x1x128xi1>, vector<1x1x128xf32>
    %169 = arith.addf %162, %168 : vector<1x1x128xf32>
    %c0_32 = arith.constant 0 : index
    %c0_33 = arith.constant 0 : index
    %c0_34 = arith.constant 0 : index
    %170 = vector.load %arg5[%c0_32, %c0_33, %c0_34] : memref<1x1x128xf32, #tpu.memory_space<vmem>>, vector<1x1x128xf32>
    tpu.vector_store %arg5[%c0_32, %c0_33, %c0_34], %169 {strides = array<i32>} : memref<1x1x128xf32, #tpu.memory_space<vmem>>, vector<1x1x128xf32>,
    return
  }
  func.func @transform_0(%arg0: i32) -> (i32, i32) {
    %c0_i32 = arith.constant 0 : i32
    %c0_i32_0 = arith.constant 0 : i32
    %c0_i32_1 = arith.constant 0 : i32
    return %c0_i32, %c0_i32_0 : i32, i32
  }
  func.func @transform_1(%arg0: i32) -> (i32, i32, i32) {
    %c0_i32 = arith.constant 0 : i32
    %c0_i32_0 = arith.constant 0 : i32
    %c0_i32_1 = arith.constant 0 : i32
    return %arg0, %c0_i32, %c0_i32_0 : i32, i32, i32
  }
  func.func @transform_2(%arg0: i32) -> (i32, i32, i32) {
    %c0_i32 = arith.constant 0 : i32
    %c0_i32_0 = arith.constant 0 : i32
    %c0_i32_1 = arith.constant 0 : i32
    return %arg0, %c0_i32, %c0_i32_0 : i32, i32, i32
  }
  func.func @transform_3(%arg0: i32) -> (i32, i32, i32) {
    %c0_i32 = arith.constant 0 : i32
    %c0_i32_0 = arith.constant 0 : i32
    %c0_i32_1 = arith.constant 0 : i32
    return %arg0, %c0_i32, %c0_i32_0 : i32, i32, i32
  }
  func.func @transform_4(%arg0: i32) -> (i32, i32, i32) {
    %c0_i32 = arith.constant 0 : i32
    %c0_i32_0 = arith.constant 0 : i32
    %c0_i32_1 = arith.constant 0 : i32
    return %arg0, %c0_i32, %c0_i32_0 : i32, i32, i32
  }
}

</mosaic_0001>

<llo_original>
// kernel: tpu_custom_call.1
$region0: #{tpu_custom_call.1}
  #allocation0 [shape = 'u32[]', space=smem, size = 0x4, offset = 0x4, fixed_abs, tag = 'smem constant byte address 0x4 - core index']
  #allocation1 [shape = 'u32[144,128]{1,0:T(1,128)}', space=vmem, size = 0x12000, scoped, tag = 'internal scratch']
  %s0 = inlined_call_operand.vmem [shape: f32[6,128], index: 0, kind: input, shape index: {}]
  %s1 = inlined_call_operand.vmem [shape: f32[2,3,5], index: 1, kind: input, shape index: {}]
  %s2 = inlined_call_operand.vmem [shape: f32[2,8,3], index: 2, kind: input, shape index: {}]
  %s3 = inlined_call_operand.vmem [shape: f32[2,16,128], index: 3, kind: input, shape index: {}]
  %s4 = inlined_call_operand.hbm [shape: f32[2,1,128], index: 4, kind: output, shape index: {}]
  %s5 = sld [smem:[#allocation0]]
  $region49: #{tpu_custom_call.1} parent=0
    _
  %s7 = ssub.s32 1, %s5
  %s8 = scalar_select 0, %s7, %s5
  $region1: #{tpu_custom_call.1} parent=0
    #allocation2 [shape = 'u8[1024]{0}', space=vmem, size = 0x400, scoped, tag = 'output window, operand 0']
    #allocation3 [shape = 's32[2]{0}', space=sflag, size = 0x8, scoped, tag = 'scoped memory for tpu_custom_call.1']
    %9 = vsyncpa [#allocation3], 0
    %s10 = scalar_lea.sflag [#allocation3], 1
    %11 = vsyncpa %s10, 0
    loop: start=0, step=1, limit=4
    $region2: #{tpu_custom_call.1} parent=1 // loop_pre_header
      _
    $region3: #{tpu_custom_call.1} parent=1 // loop_header
      %s13 = sphi 0, %s17
      %p14 = scmp.ge.s32.totalorder %s13, 4
      %s21 = sphi 0, %s21
      %s23 = sphi 0, %s21
      %s24 = sphi 0, %s23
      %s38 = sphi 0, %s24
      %s44 = sphi 0, %s46
      %s47 = sphi 0, %s44
      %s48 = sphi 0, %s47
      %s64 = sphi 0, %s48
      %s70 = sphi 0, %s72
      %s73 = sphi 0, %s70
      %s74 = sphi 0, %s73
      %s90 = sphi 0, %s74
      %s96 = sphi 0, %s98
      %s99 = sphi 0, %s96
      %s100 = sphi 0, %s99
      %s116 = sphi 0, %s100
      %s122 = sphi 0, %s124
      %s125 = sphi 0, %s122
      %s126 = sphi 0, %s125
      %s142 = sphi 0, %s126
    $region4: #{tpu_custom_call.1} parent=1 // loop_header_branch
      %16 = sbr.rel (%p14) target = $region8
    $region5: #{tpu_custom_call.1} parent=1 // loop_body
      %s18 = ssub.s32 %s13, 1
      %s19 = ssub.s32 %s13, 2
      %s20 = sadd.s32 %s13, 1
      %s22 = sadd.s32 %s21, 1
      %p25 = scmp.eq.s32.totalorder %s13, 1
      %p26 = scmp.ne.s32.totalorder %s21, %s23
      %p27 = scmp.eq.s32.totalorder %s13, 0
      %p28 = por %p26, %p27
      %p29 = scmp.ne.s32.totalorder %s21, %s23
      %p30 = scmp.eq.s32.totalorder %s18, 1
      %p31 = por %p29, %p30
      %p32 = scmp.ne.s32.totalorder %s23, %s24
      %p33 = scmp.eq.s32.totalorder %s18, 0
      %p34 = por %p32, %p33
      %p35 = scmp.ne.s32.totalorder %s23, %s24
      %p36 = scmp.eq.s32.totalorder %s19, 1
      %p37 = por %p35, %p36
      %p39 = scmp.ne.s32.totalorder %s24, %s38
      %p40 = scmp.eq.s32.totalorder %s19, 0
      %p41 = por %p39, %p40
      %s42 = ssub.s32 %s13, %s20
      %p43 = scmp.eq.s32.totalorder %s42, 0
      %s45 = sadd.s32 %s44, 1
      %s46 = scalar_select %p43, %s44, %s45
      %p49 = pneg %p43
      %p50 = scmp.eq.s32.totalorder %s13, 1
      %p51 = por %p49, %p50
      %p52 = scmp.ne.s32.totalorder %s44, %s47
      %p53 = scmp.eq.s32.totalorder %s13, 0
      %p54 = por %p52, %p53
      %p55 = scmp.ne.s32.totalorder %s44, %s47
      %p56 = scmp.eq.s32.totalorder %s18, 1
      %p57 = por %p55, %p56
      %p58 = scmp.ne.s32.totalorder %s47, %s48
      %p59 = scmp.eq.s32.totalorder %s18, 0
      %p60 = por %p58, %p59
      %p61 = scmp.ne.s32.totalorder %s47, %s48
      %p62 = scmp.eq.s32.totalorder %s19, 1
      %p63 = por %p61, %p62
      %p65 = scmp.ne.s32.totalorder %s48, %s64
      %p66 = scmp.eq.s32.totalorder %s19, 0
      %p67 = por %p65, %p66
      %s68 = ssub.s32 %s13, %s20
      %p69 = scmp.eq.s32.totalorder %s68, 0
      %s71 = sadd.s32 %s70, 1
      %s72 = scalar_select %p69, %s70, %s71
      %p75 = pneg %p69
      %p76 = scmp.eq.s32.totalorder %s13, 1
      %p77 = por %p75, %p76
      %p78 = scmp.ne.s32.totalorder %s70, %s73
      %p79 = scmp.eq.s32.totalorder %s13, 0
      %p80 = por %p78, %p79
      %p81 = scmp.ne.s32.totalorder %s70, %s73
      %p82 = scmp.eq.s32.totalorder %s18, 1
      %p83 = por %p81, %p82
      %p84 = scmp.ne.s32.totalorder %s73, %s74
      %p85 = scmp.eq.s32.totalorder %s18, 0
      %p86 = por %p84, %p85
      %p87 = scmp.ne.s32.totalorder %s73, %s74
      %p88 = scmp.eq.s32.totalorder %s19, 1
      %p89 = por %p87, %p88
      %p91 = scmp.ne.s32.totalorder %s74, %s90
      %p92 = scmp.eq.s32.totalorder %s19, 0
      %p93 = por %p91, %p92
      %s94 = ssub.s32 %s13, %s20
      %p95 = scmp.eq.s32.totalorder %s94, 0
      %s97 = sadd.s32 %s96, 1
      %s98 = scalar_select %p95, %s96, %s97
      %p101 = pneg %p95
      %p102 = scmp.eq.s32.totalorder %s13, 1
      %p103 = por %p101, %p102
      %p104 = scmp.ne.s32.totalorder %s96, %s99
      %p105 = scmp.eq.s32.totalorder %s13, 0
      %p106 = por %p104, %p105
      %p107 = scmp.ne.s32.totalorder %s96, %s99
      %p108 = scmp.eq.s32.totalorder %s18, 1
      %p109 = por %p107, %p108
      %p110 = scmp.ne.s32.totalorder %s99, %s100
      %p111 = scmp.eq.s32.totalorder %s18, 0
      %p112 = por %p110, %p111
      %p113 = scmp.ne.s32.totalorder %s99, %s100
      %p114 = scmp.eq.s32.totalorder %s19, 1
      %p115 = por %p113, %p114
      %p117 = scmp.ne.s32.totalorder %s100, %s116
      %p118 = scmp.eq.s32.totalorder %s19, 0
      %p119 = por %p117, %p118
      %s120 = ssub.s32 %s13, %s20
      %p121 = scmp.eq.s32.totalorder %s120, 0
      %s123 = sadd.s32 %s122, 1
      %s124 = scalar_select %p121, %s122, %s123
      %p127 = pneg %p121
      %p128 = scmp.eq.s32.totalorder %s13, 1
      %p129 = por %p127, %p128
      %p130 = scmp.ne.s32.totalorder %s122, %s125
      %p131 = scmp.eq.s32.totalorder %s13, 0
      %p132 = por %p130, %p131
      %p133 = scmp.ne.s32.totalorder %s122, %s125
      %p134 = scmp.eq.s32.totalorder %s18, 1
      %p135 = por %p133, %p134
      %p136 = scmp.ne.s32.totalorder %s125, %s126
      %p137 = scmp.eq.s32.totalorder %s18, 0
      %p138 = por %p136, %p137
      %p139 = scmp.ne.s32.totalorder %s125, %s126
      %p140 = scmp.eq.s32.totalorder %s19, 1
      %p141 = por %p139, %p140
      %p143 = scmp.ne.s32.totalorder %s126, %s142
      %p144 = scmp.eq.s32.totalorder %s19, 0
      %p145 = por %p143, %p144
      %p146 = scmp.le.s32.totalorder 1, %s13
      %p147 = scmp.lt.s32.totalorder %s13, 3
      %p148 = pnand %p146, %p147
      %p149 = pneg %p148
      // Predicated region
      $region9: #{tpu_custom_call.1} parent=5 // pred_check
        _
      $region10: #{tpu_custom_call.1} parent=5 // pred_check_branch
        %151 = sbr.rel (%p148) target = $region12
      $region11: #{tpu_custom_call.1} parent=5 // pred_region
        %s152 = ssub.s32 %s13, 1
        // Predicated region
        $region13: #{tpu_custom_call.1} parent=11 // pred_check
          %p153 = pneg %p34
        $region14: #{tpu_custom_call.1} parent=11 // pred_check_branch
          %155 = sbr.rel (%p153) target = $region16
        $region15: #{tpu_custom_call.1} parent=11 // pred_region
          _
        $region16: #{tpu_custom_call.1} parent=11 // pred_fallthru
          _
      $region12: #{tpu_custom_call.1} parent=5 // pred_fallthru
        _
      %p156 = scmp.lt.s32.totalorder %s13, 2
      // Predicated region
      $region17: #{tpu_custom_call.1} parent=5 // pred_check
        %p157 = pneg %p156
      $region18: #{tpu_custom_call.1} parent=5 // pred_check_branch
        %159 = sbr.rel (%p157) target = $region20
      $region19: #{tpu_custom_call.1} parent=5 // pred_region
        // Predicated region
        $region21: #{tpu_custom_call.1} parent=19 // pred_check
          %p160 = pneg %p54
        $region22: #{tpu_custom_call.1} parent=19 // pred_check_branch
          %162 = sbr.rel (%p160) target = $region24
        $region23: #{tpu_custom_call.1} parent=19 // pred_region
          %p163 = scmp.lt.s32.totalorder %s13, 1
          %s164 = scalar_select %p163, %s13, 1
          %s165 = smul.addr %s164, 4
          %s166 = scalar_lea.vmem %s1, %s165
        $region24: #{tpu_custom_call.1} parent=19 // pred_fallthru
          _
        // Predicated region
        $region25: #{tpu_custom_call.1} parent=19 // pred_check
          %p167 = pneg %p80
        $region26: #{tpu_custom_call.1} parent=19 // pred_check_branch
          %169 = sbr.rel (%p167) target = $region28
        $region27: #{tpu_custom_call.1} parent=19 // pred_region
          %p170 = scmp.lt.s32.totalorder %s13, 1
          %s171 = scalar_select %p170, %s13, 1
          %s172 = smul.addr %s171, 8
          %s173 = scalar_lea.vmem %s2, %s172
        $region28: #{tpu_custom_call.1} parent=19 // pred_fallthru
          _
        // Predicated region
        $region29: #{tpu_custom_call.1} parent=19 // pred_check
          %p174 = pneg %p106
        $region30: #{tpu_custom_call.1} parent=19 // pred_check_branch
          %176 = sbr.rel (%p174) target = $region32
        $region31: #{tpu_custom_call.1} parent=19 // pred_region
          %p177 = scmp.lt.s32.totalorder %s13, 1
          %s178 = scalar_select %p177, %s13, 1
          %s179 = smul.addr %s178, 2
          %s180 = smul.addr %s179, 8
          %s181 = scalar_lea.vmem %s3, %s180
        $region32: #{tpu_custom_call.1} parent=19 // pred_fallthru
          _
      $region20: #{tpu_custom_call.1} parent=5 // pred_fallthru
        _
      %p182 = scmp.le.s32.totalorder 1, %s13
      %p183 = scmp.lt.s32.totalorder %s13, 3
      %p184 = pnand %p182, %p183
      %p185 = pneg %p184
      // Predicated region
      $region33: #{tpu_custom_call.1} parent=5 // pred_check
        _
      $region34: #{tpu_custom_call.1} parent=5 // pred_check_branch
        %187 = sbr.rel (%p184) target = $region36
      $region35: #{tpu_custom_call.1} parent=5 // pred_region
        %s188 = ssub.s32 %s13, 1
        %p189 = pneg %p34
        %p190 = pneg %p31
        %p191 = scmp.lt.s32.totalorder %s18, 1
        %s192 = scalar_select %p191, %s18, 1
        %s193 = smul.addr %s192, 4
        %s194 = scalar_lea.vmem %s1, %s193
        %p195 = pneg %p60
        %p196 = pneg %p57
        %p197 = scmp.lt.s32.totalorder %s18, 1
        %s198 = scalar_select %p197, %s18, 1
        %s199 = smul.addr %s198, 8
        %s200 = scalar_lea.vmem %s2, %s199
        %p201 = pneg %p86
        %p202 = pneg %p83
        %p203 = scmp.lt.s32.totalorder %s18, 1
        %s204 = scalar_select %p203, %s18, 1
        %s205 = smul.addr %s204, 2
        %s206 = smul.addr %s205, 8
        %s207 = scalar_lea.vmem %s3, %s206
        %p208 = pneg %p112
        %p209 = pneg %p109
        %p210 = pneg %p138
        %p211 = pneg %p135
        %s212 = sand.u32 %s125, 1
        %s213 = scalar_lea.sflag [#allocation3], %s212
        %s214 = sand.u32 %s125, 1
        %s215 = scalar_lea.vmem [#allocation2], %s214
        %p216 = scmp.lt.s32.totalorder %s18, 1
        %s217 = scalar_select %p216, %s18, 1
        %s218 = smul.addr %s217, 4
        %s219 = scalar_lea.vmem %s1, %s218
        %p220 = scmp.lt.s32.totalorder %s18, 1
        %s221 = scalar_select %p220, %s18, 1
        %s222 = smul.addr %s221, 8
        %s223 = scalar_lea.vmem %s2, %s222
        %p224 = scmp.lt.s32.totalorder %s18, 1
        %s225 = scalar_select %p224, %s18, 1
        %s226 = smul.addr %s225, 2
        %s227 = smul.addr %s226, 8
        %s228 = scalar_lea.vmem %s3, %s227
        %v229 = vld [vmem:[%s0] sm:$0x3f]
        %v230 = vld [vmem:[%s219] sm:$0x7]
        %v231 = vlaneseq
        %v232 = vshrl.u32 %v231, 7
        %v233 = vsub.s32 2, %v232
        %v234 = vrot.slane %v229, %v233
        %236 = vset.pattern.permute.xlu0 2
        %237 = vperm.xlu0 %236, %v230
        %v238 = vpop.permute.xlu0 %237
        %v240 = vmin.f32 %v234, %v238
        %v241 = vlaneseq
        %v242 = vshrl.u32 %v241, 7
        %v243 = vsub.s32 0, %v242
        %v244 = vrot.slane %v229, %v243
        %245 = vset.pattern.permute.xlu0 0
        %246 = vperm.xlu0 %245, %v230
        %v247 = vpop.permute.xlu0 %246
        %v249 = vmax.f32 %v244, %v247
        %v250 = vsub.f32 %v240, %v249
        %v251 = vmax.f32 %v250, 0.0
        %v252 = vlaneseq
        %v253 = vshrl.u32 %v252, 7
        %v254 = vsub.s32 3, %v253
        %v255 = vrot.slane %v229, %v254
        %256 = vset.pattern.permute.xlu0 3
        %257 = vperm.xlu0 %256, %v230
        %v258 = vpop.permute.xlu0 %257
        %v260 = vmin.f32 %v255, %v258
        %v261 = vlaneseq
        %v262 = vshrl.u32 %v261, 7
        %v263 = vsub.s32 1, %v262
        %v264 = vrot.slane %v229, %v263
        %265 = vset.pattern.permute.xlu0 1
        %266 = vperm.xlu0 %265, %v230
        %v267 = vpop.permute.xlu0 %266
        %v269 = vmax.f32 %v264, %v267
        %v270 = vsub.f32 %v260, %v269
        %v271 = vmax.f32 %v270, 0.0
        %v272 = vmul.f32 %v251, %v271
        %v273 = vlaneseq
        %v274 = vshrl.u32 %v273, 7
        %v275 = vsub.s32 4, %v274
        %v276 = vrot.slane %v229, %v275
        %277 = vset.pattern.permute.xlu0 4
        %278 = vperm.xlu0 %277, %v230
        %v279 = vpop.permute.xlu0 %278
        %v281 = vadd.f32 %v276, %v279
        %v282 = vsub.f32 %v281, %v272
        %v283 = vadd.f32 %v282, 1e-12
        %v284 = vrcp.pop %v283
        %v285 = vmul.f32 %v272, %v284
        %vm286 = vcmask 1042432
        %v287 = vsel %vm286, %v285, -inf
        %v288 = vrot.slane %v287, 4
        %v289 = vmax.f32 %v287, %v288
        %v290 = vrot.slane %v289, 2
        %v291 = vmax.f32 %v289, %v290
        %v292 = vrot.slane %v291, 1
        %v293 = vmax.f32 %v291, %v292
        %vm294 = vcmp.gt.f32.partialorder %v293, 0.0
        %v295 = vsel %vm294, 1, 0
        %v296 = vcvt.s32.f32 %v295
        %v297 = vmul.f32 %v296, %v229
        %v298 = vld [vmem:[%s223] sm:$0xff]
        %vm299 = vcmp.eq.f32.partialorder %v285, %v293
        %v300 = vsel %vm299, 1, 0
        %v301 = vcvt.s32.f32 %v300
        %v302 = vsub.f32 1.0, %v301
        %v303 = vlaneseq
        %v304 = vshrl.u32 %v303, 7
        %v305 = vsub.s32 0, %v304
        %v306 = vrot.slane %v301, %v305
        %308 = vset.pattern.permute.xlu0 0
        %309 = vperm.xlu0 %308, %v298
        %v310 = vpop.permute.xlu0 %309
        %v312 = vmul.f32 %v306, %v310
        %v313 = vadd.f32 %v312, 0.0
        %v315 = vrot.slane %v302, 7
        %v317 = vmul.f32 %v301, %v315
        %v319 = vrot.slane %v317, 1
        %v321 = vsub.f32 %v302, %v319
        %v322 = vlaneseq
        %v323 = vshrl.u32 %v322, 7
        %v324 = vsub.s32 1, %v323
        %v325 = vrot.slane %v317, %v324
        %326 = vset.pattern.permute.xlu0 1
        %327 = vperm.xlu0 %326, %v298
        %v328 = vpop.permute.xlu0 %327
        %v330 = vmul.f32 %v325, %v328
        %v331 = vadd.f32 %v313, %v330
        %v333 = vrot.slane %v321, 6
        %v335 = vmul.f32 %v301, %v333
        %v336 = vlaneseq
        %v337 = vshrl.u32 %v336, 7
        %v338 = vsub.s32 2, %v337
        %v339 = vrot.slane %v335, %v338
        %340 = vset.pattern.permute.xlu0 2
        %341 = vperm.xlu0 %340, %v298
        %v342 = vpop.permute.xlu0 %341
        %v344 = vmul.f32 %v339, %v342
        %v345 = vadd.f32 %v331, %v344
        %v346 = vld [vmem:[%s228] sm:$0xff]
        %v347 = vld [vmem:[%s228 + $0x8] sm:$0xff]
        %vm348 = vcmask 1045506
        %v349 = vsel %vm348, %v347, -inf
        %v350 = vrot.slane %v349, 4
        %v351 = vmax.f32 %v349, %v350
        %v352 = vrot.slane %v351, 2
        %v353 = vmax.f32 %v351, %v352
        %v354 = vrot.slane %v353, 1
        %v355 = vmax.f32 %v353, %v354
        %v356 = vsub.f32 %v347, %v355
        %v357 = vmul.f32 %v356, 1.442695
        %v358 = vpow.pop %v357
        %v360 = vrot.slane %v358, 2
        %vm362 = vcmask 1043456
        %v363 = vsel %vm362, %v360, 0.0
        %v364 = vrot.slane %v363, 4
        %v365 = vadd.f32 %v363, %v364
        %v366 = vrot.slane %v365, 2
        %v367 = vadd.f32 %v365, %v366
        %v368 = vrot.slane %v367, 1
        %v369 = vadd.f32 %v367, %v368
        %v370 = vlog2.pop %v369
        %v371 = vmul.f32 %v370, 0.6931472
        %v372 = vadd.f32 %v371, %v355
        %v373 = vsub.f32 %v347, %v372
        %v375 = vrot.slane %v373, 6
        %v377 = vmul.f32 %v345, %v375
        %v379 = vrot.slane %v377, 4
        %v381 = vsel %vm362, %v379, 0.0
        %v382 = vrot.slane %v381, 4
        %v383 = vadd.f32 %v381, %v382
        %v384 = vrot.slane %v383, 2
        %v385 = vadd.f32 %v383, %v384
        %v386 = vrot.slane %v385, 1
        %v387 = vadd.f32 %v385, %v386
        %v388 = vsub.f32 0.0, %v387
        %v389 = vmul.f32 %v388, %v297
        %v390 = vlaneseq
        %v391 = vshrl.u32 %v390, 7
        %v392 = vsub.s32 5, %v391
        %v393 = vrot.slane %v297, %v392
        %v394 = vsub.f32 %v393, %v347
        %v395 = vmul.f32 %v394, %v394
        %vm396 = vcmask 1041408
        %v397 = vsel %vm396, %v395, 0.0
        %v398 = vrot.slane %v397, 4
        %v399 = vadd.f32 %v397, %v398
        %v400 = vrot.slane %v399, 2
        %v401 = vadd.f32 %v399, %v400
        %v402 = vrot.slane %v401, 1
        %v403 = vadd.f32 %v401, %v402
        %v404 = vmul.f32 %v403, 1.5
        %v405 = vmul.f32 %v404, %v297
        %v406 = vrsqrt.pop %v345
        %v407 = vmul.f32 %v345, %v406
        %vm408 = vcmp.eq.f32.partialorder %v345, inf
        %v409 = vsel %vm408, %v345, %v407
        %vm410 = vcmp.eq.f32.partialorder %v345, 0.0
        %v411 = vand.u32 %v345, 2147483648
        %v412 = vsel %vm410, %v411, %v409
        %v413 = vsub.f32 %v345, %v346
        %v414 = vrsqrt.pop %v346
        %v415 = vmul.f32 %v346, %v414
        %vm416 = vcmp.eq.f32.partialorder %v346, inf
        %v417 = vsel %vm416, %v346, %v415
        %vm418 = vcmp.eq.f32.partialorder %v346, 0.0
        %v419 = vand.u32 %v346, 2147483648
        %v420 = vsel %vm418, %v419, %v417
        %v421 = vsub.f32 %v412, %v420
        %v422 = vmul.f32 %v413, %v413
        %v423 = vmul.f32 %v421, %v421
        %v425 = vrot.slane %v423, 2
        %v427 = vadd.f32 %v422, %v425
        %v428 = vsel %vm396, %v427, 0.0
        %v429 = vrot.slane %v428, 4
        %v430 = vadd.f32 %v428, %v429
        %v431 = vrot.slane %v430, 2
        %v432 = vadd.f32 %v430, %v431
        %v433 = vrot.slane %v432, 1
        %v434 = vadd.f32 %v432, %v433
        %v435 = vadd.f32 %v434, 0.0
        %v437 = vrot.slane %v346, 4
        %v439 = vsub.f32 %v345, %v437
        %v441 = vrot.slane %v420, 4
        %v443 = vsub.f32 %v412, %v441
        %v444 = vmul.f32 %v439, %v439
        %v445 = vmul.f32 %v443, %v443
        %v447 = vrot.slane %v445, 2
        %v449 = vadd.f32 %v444, %v447
        %v450 = vsel %vm396, %v449, 0.0
        %v451 = vrot.slane %v450, 4
        %v452 = vadd.f32 %v450, %v451
        %v453 = vrot.slane %v452, 2
        %v454 = vadd.f32 %v452, %v453
        %v455 = vrot.slane %v454, 1
        %v456 = vadd.f32 %v454, %v455
        %v457 = vadd.f32 %v435, %v456
        %v458 = vmul.f32 %v457, 5.0
        %v459 = vmul.f32 %v458, %v297
        %vm460 = vcmask 1045509
        %v461 = vsel %vm460, %v459, 0.0
        %462 = vadd.xlane.f32.xlu0 %v461
        %v463 = vpop.xlane.xlu0 %462
        %v464 = vsel %vm460, %v389, 0.0
        %465 = vadd.xlane.f32.xlu0 %v464
        %v466 = vpop.xlane.xlu0 %465
        %v467 = vsel %vm460, %v405, 0.0
        %468 = vadd.xlane.f32.xlu0 %v467
        %v469 = vpop.xlane.xlu0 %468
        %v470 = vlaneseq
        %v471 = vand.u32 %v470, 127
        %vm472 = vcmp.eq.s32.totalorder %v471, 0
        %v473 = vsel %vm472, %v463, 0.0
        %vm474 = vcmp.eq.s32.totalorder %v471, 1
        %v475 = vsel %vm474, %v466, 0.0
        %v476 = vadd.f32 %v473, %v475
        %vm477 = vcmp.eq.s32.totalorder %v471, 2
        %v478 = vsel %vm477, %v469, 0.0
        %v479 = vadd.f32 %v476, %v478
        %480 = vst [vmem:[%s215 - $0x5] sm:$0x20] %v479
        %s481 = sand.u32 %s125, 1
        %s482 = scalar_lea.sflag [#allocation3], %s481
        %s483 = sand.u32 %s125, 1
        %s484 = scalar_lea.vmem [#allocation2], %s483
        // Predicated region
        $region37: #{tpu_custom_call.1} parent=35 // pred_check
          %p485 = pneg %p135
        $region38: #{tpu_custom_call.1} parent=35 // pred_check_branch
          %487 = sbr.rel (%p485) target = $region40
        $region39: #{tpu_custom_call.1} parent=35 // pred_region
          %s489 = ssub.s32 16, 16
          %490 = vsyncadd %s482, %s489
          %s491 = smul.addr %s18, 16
          %s492 = scalar_lea.hbm %s4, %s491
          %s494 = sshll.u32 %s484, 4
          %s495 = int_to_ptr.vmem [resolvable:$true] %s494
          %497 = dma.vmem_to_hbm [thread:$0]  %s495, 16, %s492, %s482
        $region40: #{tpu_custom_call.1} parent=35 // pred_fallthru
          _
      $region36: #{tpu_custom_call.1} parent=5 // pred_fallthru
        _
      %p498 = scmp.le.s32.totalorder 2, %s13
      // Predicated region
      $region41: #{tpu_custom_call.1} parent=5 // pred_check
        %p499 = pneg %p498
      $region42: #{tpu_custom_call.1} parent=5 // pred_check_branch
        %501 = sbr.rel (%p499) target = $region44
      $region43: #{tpu_custom_call.1} parent=5 // pred_region
        %s502 = ssub.s32 %s13, 2
        // Predicated region
        $region45: #{tpu_custom_call.1} parent=43 // pred_check
          %p503 = pneg %p141
        $region46: #{tpu_custom_call.1} parent=43 // pred_check_branch
          %505 = sbr.rel (%p503) target = $region48
        $region47: #{tpu_custom_call.1} parent=43 // pred_region
          %s506 = sand.u32 %s126, 1
          %s507 = scalar_lea.sflag [#allocation3], %s506
          %s508 = sand.u32 %s126, 1
          %s509 = scalar_lea.vmem [#allocation2], %s508
          %510 = dma.done %s507, 16
        $region48: #{tpu_custom_call.1} parent=43 // pred_fallthru
          _
      $region44: #{tpu_custom_call.1} parent=5 // pred_fallthru
        _
    $region6: #{tpu_custom_call.1} parent=1 // loop_footer
      %s17 = sadd.s32 1, %s13
    $region7: #{tpu_custom_call.1} parent=1 // loop_footer_branch
      %12 = sbr.rel target = $region3
    $region8: #{tpu_custom_call.1} parent=1 // loop_exit
      _
    %511 = vsyncpa [#allocation3], 1
    %s512 = scalar_lea.sflag [#allocation3], 1
    %513 = vsyncpa %s512, 1

</llo_original>
